<compile_context>
chip_gen: v6e
topology: v6e:2x2x1
jax: 0.10.0
libtpu: 0.0.40
codegen_flags: <defaults>
</compile_context>

<pallas_src>
import functools

import jax
import jax.numpy as jnp
from jax.experimental import pallas as pl
from jax.experimental.pallas import tpu as pltpu


# ----------------------------------------------------------------------------
# Helpers
# ----------------------------------------------------------------------------
def _round_up(x, m):
    return ((x + m - 1) // m) * m


def _pick_conv_rows(H, Wpp, cap_rows=2048):
    """Row tile for the conv: a multiple of Wpp dividing H*Wpp, <= cap_rows."""
    Mo = H * Wpp
    if Mo <= cap_rows:
        return Mo
    kmax = max(1, cap_rows // Wpp)
    for k in range(min(H, kmax), 0, -1):
        if H % k == 0:
            return k * Wpp
    return Wpp


def _pick_pool_rows(Ho, Wpp, C, cap_bytes=2 << 20):
    """Pooled-row tile: divides Ho, keeps the input block under cap_bytes."""
    cap = max(1, cap_bytes // (4 * Wpp * C))    # bf16: 2*Wpp*C per pooled row * 2B
    if cap >= Ho:
        return Ho
    for th in range(cap, 0, -1):
        if Ho % th == 0:
            return th
    return 1


# ----------------------------------------------------------------------------
# Pallas kernels
# ----------------------------------------------------------------------------
def _conv_direct_kernel(x_ref, w_ref, b_ref, o_ref):
    """One-matmul conv for tiny Cin (pre-im2col'd input).

    x_ref: (1, tm, 9*Cin) bf16 ; w_ref: (1, 9*Cin, tn) bf16 ; b_ref: (1, tn) f32
    o_ref: (1, tm, tn) bf16
    """
    tm = x_ref.shape[1]
    tn = o_ref.shape[-1]
    acc = jnp.broadcast_to(b_ref[...], (tm, tn)).astype(jnp.float32)
    acc = acc + jnp.dot(x_ref[0], w_ref[0], preferred_element_type=jnp.float32)
    o_ref[0] = jnp.maximum(acc, 0.0).astype(o_ref.dtype)


def _conv_dxpack_kernel(x_ref, w_ref, b_ref, o_ref, xk_ref, *, Wpp, tm, cin):
    """3x3 conv (pad=1) on one row tile: dx taps packed along K (3 matmuls).

    x_ref : (1, (H+2)*Wpp+2, Cin) bf16  whole flattened zero-padded image
    w_ref : (3, 3*Cin, tn)        bf16  dy-major, (dx,Cin) packed along K
    b_ref : (1, tn)               f32
    o_ref : (1, tm, tn)           bf16  rows m = oy*Wpp + ox (junk cols >= W)
    xk_ref: (tm + 2*Wpp, 3*Cin)   bf16  scratch: dx-packed row window
    """
    tn = o_ref.shape[-1]
    m0 = pl.multiple_of(pl.program_id(2) * tm, 8)
    L = tm + 2 * Wpp
    # Pack the three dx-shifted row windows along the contraction dim.
    for dx in range(3):
        xk_ref[:, pl.ds(dx * cin, cin)] = x_ref[0, pl.ds(m0 + dx, L), :]
    acc = jnp.broadcast_to(b_ref[...], (tm, tn)).astype(jnp.float32)  # bias init
    for dy in range(3):
        acc = acc + jnp.dot(xk_ref[pl.ds(dy * Wpp, tm), :], w_ref[dy],
                            preferred_element_type=jnp.float32)
    o_ref[0] = jnp.maximum(acc, 0.0).astype(o_ref.dtype)              # fused ReLU


def _maxpool2x2_kernel(x_ref, o_ref, *, Wph, Wo, C):
    """2x2/stride-2 max pool on the pitched conv output (no glue copies).

    x_ref: (1, th, 2*Wph, 2*C)  rows s<Wph are dy=0, s>=Wph are dy=1;
                                lanes [0,C) are dx=0, [C,2C) are dx=1.
    o_ref: (1, th, Wo, C)
    """
    top = x_ref[0, :, pl.ds(0, Wph), :]
    bot = x_ref[0, :, pl.ds(Wph, Wph), :]
    v = jnp.maximum(top, bot)                       # vertical max  (th, Wph, 2C)
    h = jnp.maximum(v[:, :, :C], v[:, :, C:])       # horizontal max (th, Wph, C)
    o_ref[0] = h[:, :Wo, :]


# ----------------------------------------------------------------------------
# Layer wrappers
# ----------------------------------------------------------------------------
def conv3x3_relu(x_nhwc, w_hwio, b):
    """3x3 conv, stride 1, pad 1, fused bias+ReLU.  Returns pitched output.

    Output: (junky, meta) with junky (N, H*Wpp, Cout) bf16 and
            meta = (H, W, Wpp, Cout); columns x >= W of each row are junk.
    """
    N, H, W, Cin = x_nhwc.shape
    Cout = w_hwio.shape[-1]
    Wpp = _round_up(W + 2, 8)                 # aligned row pitch
    Hp = H + 2
    Mo = H * Wpp
    Mi = Hp * Wpp + 2                         # +2 tail rows keep (dy=2,dx=2) in-bounds

    # Glue: zero-pad spatially (right pad up to the aligned pitch) and flatten.
    xp = jnp.pad(x_nhwc.astype(jnp.bfloat16),
                 ((0, 0), (1, 1), (1, Wpp - W - 1), (0, 0)))
    xflat = jnp.pad(xp.reshape(N, Hp * Wpp, Cin), ((0, 0), (0, 2), (0, 0)))

    wf = w_hwio.astype(jnp.bfloat16)
    b2d = b.astype(jnp.float32).reshape(1, Cout)

    tn = 128 if Cout % 128 == 0 else Cout     # lane-dense weight/output tiles
    tm = _pick_conv_rows(H, Wpp)
    grid = (N, Cout // tn, Mo // tm)

    direct = Cin < 64
    if direct:
        # Tiny-Cin layer (VGG conv1_1): small XLA im2col -> single K=9*Cin matmul.
        offs = [dy * Wpp + dx for dy in range(3) for dx in range(3)]
        xin = jnp.concatenate([xflat[:, t:t + Mo, :] for t in offs], axis=-1)
        wk = wf.reshape(1, 9 * Cin, Cout)
        x_spec = pl.BlockSpec((1, tm, 9 * Cin), lambda n, j, m: (n, m, 0))
        kernel = _conv_direct_kernel
        scratch = []
    else:
        xin = xflat
        wk = wf.reshape(3, 3 * Cin, Cout)
        x_spec = pl.BlockSpec((1, Mi, Cin), lambda n, j, m: (n, 0, 0))
        kernel = functools.partial(_conv_dxpack_kernel, Wpp=Wpp, tm=tm, cin=Cin)
        scratch = [pltpu.VMEM((tm + 2 * Wpp, 3 * Cin), jnp.bfloat16)]

    out = pl.pallas_call(
        kernel,
        out_shape=jax.ShapeDtypeStruct((N, Mo, Cout), jnp.bfloat16),
        grid_spec=pltpu.PrefetchScalarGridSpec(
            num_scalar_prefetch=0,
            grid=grid,
            in_specs=[
                x_spec,
                pl.BlockSpec(wk.shape[:2] + (tn,), lambda n, j, m: (0, 0, j)),
                pl.BlockSpec((1, tn), lambda n, j, m: (0, j)),
            ],
            out_specs=pl.BlockSpec((1, tm, tn), lambda n, j, m: (n, m, j)),
            scratch_shapes=scratch,
        ),
        compiler_params=pltpu.CompilerParams(
            dimension_semantics=("parallel", "parallel", "parallel"),
            vmem_limit_bytes=32 * 1024 * 1024,
        ),
    )(xin, wk, b2d)
    return out, (H, W, Wpp, Cout)


def maxpool2x2(junky, meta):
    """MaxPool2d(2, 2) reading the pitched conv output directly."""
    H, W, Wpp, C = meta
    assert H % 2 == 0 and W % 2 == 0
    N = junky.shape[0]
    Ho, Wo, Wph = H // 2, W // 2, Wpp // 2
    # Free re-grouping: (N, H*Wpp, C) -> (N, H/2, 2*Wph, 2*C); no data movement.
    xv = junky.reshape(N, Ho, 2 * Wph, 2 * C)
    th = _pick_pool_rows(Ho, Wpp, C)

    return pl.pallas_call(
        functools.partial(_maxpool2x2_kernel, Wph=Wph, Wo=Wo, C=C),
        out_shape=jax.ShapeDtypeStruct((N, Ho, Wo, C), junky.dtype),
        grid_spec=pltpu.PrefetchScalarGridSpec(
            num_scalar_prefetch=0,
            grid=(N, Ho // th),
            in_specs=[pl.BlockSpec((1, th, 2 * Wph, 2 * C),
                                   lambda n, p: (n, p, 0, 0))],
            out_specs=pl.BlockSpec((1, th, Wo, C), lambda n, p: (n, p, 0, 0)),
        ),
        compiler_params=pltpu.CompilerParams(
            dimension_semantics=("parallel", "parallel"),
            vmem_limit_bytes=32 * 1024 * 1024,
        ),
    )(xv)


def _junky_to_nhwc(junky, meta):
    H, W, Wpp, C = meta
    N = junky.shape[0]
    return junky.reshape(N, H, Wpp, C)[:, :, :W, :]


def _junky_to_nchw_f32(junky, meta):
    # TODO(synk): kept as XLA glue; consumers accepting NHWC bf16 would avoid it.
    x = _junky_to_nhwc(junky, meta)
    return jnp.transpose(x, (0, 3, 1, 2)).astype(jnp.float32)


# ----------------------------------------------------------------------------
# VGG16 "features" structure (torchvision layer ids) and FeatureExtractor
# ----------------------------------------------------------------------------
# (conv_layer_id, Cin, Cout) triples; 'M' = MaxPool2d(2,2).  Every conv id `c`
# is followed by ReLU at id `c+1`, so conv+bias+ReLU is fused exactly.
_VGG16_FEATURES = [
    (0, 3, 64), (2, 64, 64), "M",
    (5, 64, 128), (7, 128, 128), "M",
    (10, 128, 256), (12, 256, 256), (14, 256, 256), "M",
    (17, 256, 512), (19, 512, 512), (21, 512, 512), "M",
    (24, 512, 512), (26, 512, 512), (28, 512, 512), "M",
]
SELECTED_LAYERS = [3, 6, 8, 11, 13, 15, 18, 20, 22, 25, 27, 29]


def init_vgg16_params(key):
    # Deterministic He-style init with the exact VGG16 weight shapes (HWIO).
    params = {}
    for item in _VGG16_FEATURES:
        if isinstance(item, str):
            continue
        cid, cin, cout = item
        key, kw = jax.random.split(key)
        std = (2.0 / (9 * cin)) ** 0.5
        w = std * jax.random.normal(kw, (3, 3, cin, cout), jnp.float32)
        params[cid] = (w.astype(jnp.bfloat16), jnp.zeros((cout,), jnp.float32))
    return params


def feature_extractor(x_nchw, params):
    """Mirrors FeatureExtractor.forward: list of outputs after selected ReLUs."""
    x = jnp.transpose(x_nchw, (0, 2, 3, 1))          # NCHW -> NHWC
    feats = []
    n_items = len(_VGG16_FEATURES)
    for idx, item in enumerate(_VGG16_FEATURES):
        if isinstance(item, str):
            continue                                  # pools consumed below
        cid, _, _ = item
        w, b = params[cid]
        junky, meta = conv3x3_relu(x, w, b)           # conv(cid) + ReLU(cid+1)
        if cid + 1 in SELECTED_LAYERS:
            feats.append(_junky_to_nchw_f32(junky, meta))
        nxt = _VGG16_FEATURES[idx + 1] if idx + 1 < n_items else None
        if nxt == "M":
            x = maxpool2x2(junky, meta)               # pool fed from pitched layout
        else:
            x = _junky_to_nhwc(junky, meta)
    # Note: the final pool (layer id 30) has no effect on the returned features.
    return feats


# ----------------------------------------------------------------------------
# Small numerical self-checks (against XLA refs on bf16-quantized inputs)
# ----------------------------------------------------------------------------
def _conv_ref(x_nhwc, w_hwio, b):
    xq = x_nhwc.astype(jnp.bfloat16).astype(jnp.float32)
    wq = w_hwio.astype(jnp.bfloat16).astype(jnp.float32)
    y = jax.lax.conv_general_dilated(
        xq, wq, window_strides=(1, 1), padding="SAME",
        dimension_numbers=("NHWC", "HWIO", "NHWC"))
    return jnp.maximum(y + b.reshape(1, 1, 1, -1), 0.0)


def _unit_checks():
    key = jax.random.PRNGKey(42)
    k1, k2, k3, k4 = jax.random.split(key, 4)

    # Conv, tiny-Cin (im2col / single-matmul) path.
    x = jax.random.normal(k1, (2, 8, 12, 3), jnp.float32)
    w = 0.3 * jax.random.normal(k2, (3, 3, 3, 64), jnp.float32)
    b = 0.05 * jnp.arange(64, dtype=jnp.float32)
    junky, meta = conv3x3_relu(x, w, b)
    mine = _junky_to_nhwc(junky, meta).astype(jnp.float32)
    ref = _conv_ref(x, w, b)
    assert mine.shape == ref.shape
    assert bool(jnp.allclose(mine, ref, atol=5e-2, rtol=5e-2))

    # Conv, dx-packed (K = 3*Cin) path with lane-dense 128-wide Cout tile.
    x = jax.random.normal(k3, (2, 8, 12, 64), jnp.float32)
    w = 0.1 * jax.random.normal(k4, (3, 3, 64, 128), jnp.float32)
    b = 0.05 * jnp.arange(128, dtype=jnp.float32)
    junky, meta = conv3x3_relu(x, w, b)
    mine = _junky_to_nhwc(junky, meta).astype(jnp.float32)
    ref = _conv_ref(x, w, b)
    assert bool(jnp.allclose(mine, ref, atol=5e-2, rtol=5e-2))

    # Max-pool from the pitched layout.
    xpool = jax.random.normal(k1, (2, 8, 12, 64), jnp.float32).astype(jnp.bfloat16)
    Wpp = 16
    junky = jnp.pad(xpool, ((0, 0), (0, 0), (0, Wpp - 12), (0, 0)))
    junky = junky.reshape(2, 8 * Wpp, 64)
    pooled = maxpool2x2(junky, (8, 12, Wpp, 64))
    ref_p = xpool.reshape(2, 4, 2, 6, 2, 64).max(axis=(2, 4))
    assert bool(jnp.array_equal(pooled, ref_p))


# ----------------------------------------------------------------------------
if __name__ == "__main__":
    _unit_checks()

    key = jax.random.PRNGKey(0)
    kp, kx = jax.random.split(key)
    params = init_vgg16_params(kp)
    x = jax.random.normal(kx, (2, 3, 32, 32), jnp.float32)   # NCHW input

    fwd = jax.jit(feature_extractor)
    feats = jax.block_until_ready(fwd(x, params))

    expected_shapes = [
        (2, 64, 32, 32), (2, 128, 16, 16), (2, 128, 16, 16),
        (2, 256, 8, 8), (2, 256, 8, 8), (2, 256, 8, 8),
        (2, 512, 4, 4), (2, 512, 4, 4), (2, 512, 4, 4),
        (2, 512, 2, 2), (2, 512, 2, 2), (2, 512, 2, 2),
    ]
    assert len(feats) == len(expected_shapes)
    for f, s in zip(feats, expected_shapes):
        assert tuple(f.shape) == s, (tuple(f.shape), s)
        assert f.dtype == jnp.float32
        assert bool(jnp.all(jnp.isfinite(f)))

    print("KERNEL_OK")
</pallas_src>

<mosaic_0001>
module attributes {stable_mosaic.version = 11 : i64} {
  func.func @_conv_direct_kernel(%arg0: i32, %arg1: i32, %arg2: i32, %arg3: memref<1x128x27xbf16, #tpu.memory_space<vmem>>, %arg4: memref<1x27x64xbf16, #tpu.memory_space<vmem>>, %arg5: memref<1x64xf32, #tpu.memory_space<vmem>>, %arg6: memref<1x128x64xbf16, #tpu.memory_space<vmem>>) attributes {dimension_semantics = [#tpu.dimension_semantics<parallel>, #tpu.dimension_semantics<parallel>, #tpu.dimension_semantics<parallel>], iteration_bounds = array<i64: 2, 1, 1>, scalar_prefetch = 0 : i64, scratch_operands = 0 : i64, tpu.core_type = #tpu.core_type<tc>, window_params = [{transform_indices = @transform_0, window_bounds = array<i64: 1, 128, 27>}, {transform_indices = @transform_1, window_bounds = array<i64: 1, 27, 64>}, {transform_indices = @transform_2, window_bounds = array<i64: 1, 64>}, {transform_indices = @transform_3, window_bounds = array<i64: 1, 128, 64>}]} {
    %c0 = arith.constant 0 : index
    %c0_0 = arith.constant 0 : index
    %0 = vector.load %arg5[%c0, %c0_0] : memref<1x64xf32, #tpu.memory_space<vmem>>, vector<1x64xf32>
    %1 = vector.shape_cast %0 : vector<1x64xf32> to vector<1x64xf32>
    %2 = vector.broadcast %1 : vector<1x64xf32> to vector<128x64xf32>
    %c0_1 = arith.constant 0 : index
    %c0_2 = arith.constant 0 : index
    %c0_3 = arith.constant 0 : index
    %3 = vector.load %arg3[%c0_1, %c0_2, %c0_3] : memref<1x128x27xbf16, #tpu.memory_space<vmem>>, vector<1x128x27xbf16>
    %4 = vector.shape_cast %3 : vector<1x128x27xbf16> to vector<128x27xbf16>
    %c0_4 = arith.constant 0 : index
    %c0_5 = arith.constant 0 : index
    %c0_6 = arith.constant 0 : index
    %5 = vector.load %arg4[%c0_4, %c0_5, %c0_6] : memref<1x27x64xbf16, #tpu.memory_space<vmem>>, vector<1x27x64xbf16>
    %6 = vector.shape_cast %5 : vector<1x27x64xbf16> to vector<27x64xbf16>
    %cst = arith.constant dense<0.000000e+00> : vector<128x64xf32>
    %7 = tpu.matmul %4, %6, %cst {dimension_numbers = #tpu.dot_dimension_numbers<[1], [0], [0], [1], [0, 0, 1, 1], [], []>} : vector<128x27xbf16>, vector<27x64xbf16>, vector<128x64xf32> -> vector<128x64xf32>
    %8 = arith.addf %2, %7 : vector<128x64xf32>
    %cst_7 = arith.constant 0.000000e+00 : f32
    %9 = vector.broadcast %cst_7 : f32 to vector<128x64xf32>
    %10 = arith.maximumf %8, %9 : vector<128x64xf32>
    %11 = arith.truncf %10 : vector<128x64xf32> to vector<128x64xbf16>
    %c0_8 = arith.constant 0 : index
    %c0_9 = arith.constant 0 : index
    %c0_10 = arith.constant 0 : index
    %12 = vector.load %arg6[%c0_8, %c0_9, %c0_10] : memref<1x128x64xbf16, #tpu.memory_space<vmem>>, vector<1x128x64xbf16>
    %13 = vector.shape_cast %12 : vector<1x128x64xbf16> to vector<128x64xbf16>
    %14 = vector.shape_cast %11 : vector<128x64xbf16> to vector<1x128x64xbf16>
    tpu.vector_store %arg6[%c0_8, %c0_9, %c0_10], %14 {strides = array<i32>} : memref<1x128x64xbf16, #tpu.memory_space<vmem>>, vector<1x128x64xbf16>,
    return
  }
  func.func @transform_0(%arg0: i32, %arg1: i32, %arg2: i32) -> (i32, i32, i32) {
    %c0_i32 = arith.constant 0 : i32
    %c0_i32_0 = arith.constant 0 : i32
    return %arg0, %arg2, %c0_i32 : i32, i32, i32
  }
  func.func @transform_1(%arg0: i32, %arg1: i32, %arg2: i32) -> (i32, i32, i32) {
    %c0_i32 = arith.constant 0 : i32
    %c0_i32_0 = arith.constant 0 : i32
    %c0_i32_1 = arith.constant 0 : i32
    return %c0_i32, %c0_i32_0, %arg1 : i32, i32, i32
  }
  func.func @transform_2(%arg0: i32, %arg1: i32, %arg2: i32) -> (i32, i32) {
    %c0_i32 = arith.constant 0 : i32
    %c0_i32_0 = arith.constant 0 : i32
    return %c0_i32, %arg1 : i32, i32
  }
  func.func @transform_3(%arg0: i32, %arg1: i32, %arg2: i32) -> (i32, i32, i32) {
    %c0_i32 = arith.constant 0 : i32
    return %arg0, %arg2, %arg1 : i32, i32, i32
  }
}

</mosaic_0001>

<llo_original>
// kernel: tpu_custom_call.1
$region0: #{tpu_custom_call.1}
  #allocation0 [shape = 'u32[]', space=smem, size = 0x4, offset = 0x4, fixed_abs, tag = 'smem constant byte address 0x4 - core index']
  #allocation1 [shape = 'u32[144,128]{1,0:T(1,128)}', space=vmem, size = 0x12000, scoped, tag = 'internal scratch']
  %s0 = inlined_call_operand.vmem [shape: bf16[2,128,27], index: 0, kind: input, shape index: {}]
  %s1 = inlined_call_operand.vmem [shape: bf16[1,27,64], index: 1, kind: input, shape index: {}]
  %s2 = inlined_call_operand.vmem [shape: f32[1,64], index: 2, kind: input, shape index: {}]
  %s3 = inlined_call_operand.vmem [shape: bf16[2,128,64], index: 3, kind: output, shape index: {}]
  %s4 = sld [smem:[#allocation0]]
  $region45: #{tpu_custom_call.1} parent=0
    _
  %s6 = ssub.s32 1, %s4
  %s7 = scalar_select 0, %s6, %s4
  loop: start=0, step=1, limit=4
  $region2: #{tpu_custom_call.1} parent=0 // loop_pre_header
    _
  $region3: #{tpu_custom_call.1} parent=0 // loop_header
    %s9 = sphi 0, %s13
    %p10 = scmp.ge.s32.totalorder %s9, 4
    %s16 = sphi 0, %s35
    %s17 = sphi 0, %s31
    %s18 = sphi 0, %s27
    %s19 = sphi 0, %s16
    %s20 = sphi 0, %s17
    %s21 = sphi 0, %s18
    %s22 = sphi 0, %s19
    %s23 = sphi 0, %s20
    %s24 = sphi 0, %s21
    %s40 = sphi 0, %s42
    %s43 = sphi 0, %s40
    %s44 = sphi 0, %s43
    %s60 = sphi 0, %s44
    %s66 = sphi 0, %s68
    %s69 = sphi 0, %s66
    %s70 = sphi 0, %s69
    %s86 = sphi 0, %s70
    %s92 = sphi 0, %s94
    %s95 = sphi 0, %s92
    %s96 = sphi 0, %s95
    %s112 = sphi 0, %s96
    %s122 = sphi 0, %s124
    %s125 = sphi 0, %s122
    %s126 = sphi 0, %s125
    %s142 = sphi 0, %s126
  $region4: #{tpu_custom_call.1} parent=0 // loop_header_branch
    %12 = sbr.rel (%p10) target = $region8
  $region5: #{tpu_custom_call.1} parent=0 // loop_body
    %s14 = ssub.s32 %s9, 1
    %s15 = ssub.s32 %s9, 2
    %s25 = sadd.s32 1, %s18
    %p26 = scmp.ge.s32.totalorder %s25, 1
    %s27 = scalar_select %p26, 0, %s25
    %s28 = sadd.s32 1, %s17
    %s29 = scalar_select %p26, %s28, %s17
    %p30 = scmp.ge.s32.totalorder %s29, 1
    %s31 = scalar_select %p30, 0, %s29
    %s32 = sadd.s32 1, %s16
    %s33 = scalar_select %p30, %s32, %s16
    %p34 = scmp.ge.s32.totalorder %s33, 2
    %s35 = scalar_select %p34, 0, %s33
    %s36 = ssub.s32 %s16, %s35
    %s37 = ssub.s32 %s18, %s27
    %s38 = sor.u32 %s36, %s37
    %p39 = scmp.eq.s32.totalorder %s38, 0
    %s41 = sadd.s32 %s40, 1
    %s42 = scalar_select %p39, %s40, %s41
    %p45 = pneg %p39
    %p46 = scmp.eq.s32.totalorder %s9, 1
    %p47 = por %p45, %p46
    %p48 = scmp.ne.s32.totalorder %s40, %s43
    %p49 = scmp.eq.s32.totalorder %s9, 0
    %p50 = por %p48, %p49
    %p51 = scmp.ne.s32.totalorder %s40, %s43
    %p52 = scmp.eq.s32.totalorder %s14, 1
    %p53 = por %p51, %p52
    %p54 = scmp.ne.s32.totalorder %s43, %s44
    %p55 = scmp.eq.s32.totalorder %s14, 0
    %p56 = por %p54, %p55
    %p57 = scmp.ne.s32.totalorder %s43, %s44
    %p58 = scmp.eq.s32.totalorder %s15, 1
    %p59 = por %p57, %p58
    %p61 = scmp.ne.s32.totalorder %s44, %s60
    %p62 = scmp.eq.s32.totalorder %s15, 0
    %p63 = por %p61, %p62
    %s64 = ssub.s32 %s17, %s31
    %p65 = scmp.eq.s32.totalorder %s64, 0
    %s67 = sadd.s32 %s66, 1
    %s68 = scalar_select %p65, %s66, %s67
    %p71 = pneg %p65
    %p72 = scmp.eq.s32.totalorder %s9, 1
    %p73 = por %p71, %p72
    %p74 = scmp.ne.s32.totalorder %s66, %s69
    %p75 = scmp.eq.s32.totalorder %s9, 0
    %p76 = por %p74, %p75
    %p77 = scmp.ne.s32.totalorder %s66, %s69
    %p78 = scmp.eq.s32.totalorder %s14, 1
    %p79 = por %p77, %p78
    %p80 = scmp.ne.s32.totalorder %s69, %s70
    %p81 = scmp.eq.s32.totalorder %s14, 0
    %p82 = por %p80, %p81
    %p83 = scmp.ne.s32.totalorder %s69, %s70
    %p84 = scmp.eq.s32.totalorder %s15, 1
    %p85 = por %p83, %p84
    %p87 = scmp.ne.s32.totalorder %s70, %s86
    %p88 = scmp.eq.s32.totalorder %s15, 0
    %p89 = por %p87, %p88
    %s90 = ssub.s32 %s17, %s31
    %p91 = scmp.eq.s32.totalorder %s90, 0
    %s93 = sadd.s32 %s92, 1
    %s94 = scalar_select %p91, %s92, %s93
    %p97 = pneg %p91
    %p98 = scmp.eq.s32.totalorder %s9, 1
    %p99 = por %p97, %p98
    %p100 = scmp.ne.s32.totalorder %s92, %s95
    %p101 = scmp.eq.s32.totalorder %s9, 0
    %p102 = por %p100, %p101
    %p103 = scmp.ne.s32.totalorder %s92, %s95
    %p104 = scmp.eq.s32.totalorder %s14, 1
    %p105 = por %p103, %p104
    %p106 = scmp.ne.s32.totalorder %s95, %s96
    %p107 = scmp.eq.s32.totalorder %s14, 0
    %p108 = por %p106, %p107
    %p109 = scmp.ne.s32.totalorder %s95, %s96
    %p110 = scmp.eq.s32.totalorder %s15, 1
    %p111 = por %p109, %p110
    %p113 = scmp.ne.s32.totalorder %s96, %s112
    %p114 = scmp.eq.s32.totalorder %s15, 0
    %p115 = por %p113, %p114
    %s116 = ssub.s32 %s16, %s35
    %s117 = ssub.s32 %s18, %s27
    %s118 = sor.u32 %s116, %s117
    %s119 = ssub.s32 %s17, %s31
    %s120 = sor.u32 %s118, %s119
    %p121 = scmp.eq.s32.totalorder %s120, 0
    %s123 = sadd.s32 %s122, 1
    %s124 = scalar_select %p121, %s122, %s123
    %p127 = pneg %p121
    %p128 = scmp.eq.s32.totalorder %s9, 1
    %p129 = por %p127, %p128
    %p130 = scmp.ne.s32.totalorder %s122, %s125
    %p131 = scmp.eq.s32.totalorder %s9, 0
    %p132 = por %p130, %p131
    %p133 = scmp.ne.s32.totalorder %s122, %s125
    %p134 = scmp.eq.s32.totalorder %s14, 1
    %p135 = por %p133, %p134
    %p136 = scmp.ne.s32.totalorder %s125, %s126
    %p137 = scmp.eq.s32.totalorder %s14, 0
    %p138 = por %p136, %p137
    %p139 = scmp.ne.s32.totalorder %s125, %s126
    %p140 = scmp.eq.s32.totalorder %s15, 1
    %p141 = por %p139, %p140
    %p143 = scmp.ne.s32.totalorder %s126, %s142
    %p144 = scmp.eq.s32.totalorder %s15, 0
    %p145 = por %p143, %p144
    %p146 = scmp.le.s32.totalorder 1, %s9
    %p147 = scmp.lt.s32.totalorder %s9, 3
    %p148 = pnand %p146, %p147
    %p149 = pneg %p148
    // Predicated region
    $region9: #{tpu_custom_call.1} parent=5 // pred_check
      _
    $region10: #{tpu_custom_call.1} parent=5 // pred_check_branch
      %151 = sbr.rel (%p148) target = $region12
    $region11: #{tpu_custom_call.1} parent=5 // pred_region
      %s152 = ssub.s32 %s9, 1
      // Predicated region
      $region13: #{tpu_custom_call.1} parent=11 // pred_check
        %p153 = pneg %p82
      $region14: #{tpu_custom_call.1} parent=11 // pred_check_branch
        %155 = sbr.rel (%p153) target = $region16
      $region15: #{tpu_custom_call.1} parent=11 // pred_region
        %p156 = scmp.lt.s32.totalorder %s20, 0
        %s157 = scalar_select %p156, %s20, 0
        %s158 = smul.addr %s157, 4
        %s159 = scalar_lea.vmem %s1, %s158
      $region16: #{tpu_custom_call.1} parent=11 // pred_fallthru
        _
      // Predicated region
      $region17: #{tpu_custom_call.1} parent=11 // pred_check
        %p160 = pneg %p108
      $region18: #{tpu_custom_call.1} parent=11 // pred_check_branch
        %162 = sbr.rel (%p160) target = $region20
      $region19: #{tpu_custom_call.1} parent=11 // pred_region
        %p163 = scmp.lt.s32.totalorder %s20, 0
        %s164 = scalar_select %p163, %s20, 0
        %s165 = scalar_lea.vmem %s2, %s164
      $region20: #{tpu_custom_call.1} parent=11 // pred_fallthru
        _
    $region12: #{tpu_custom_call.1} parent=5 // pred_fallthru
      _
    %p166 = scmp.lt.s32.totalorder %s9, 2
    // Predicated region
    $region21: #{tpu_custom_call.1} parent=5 // pred_check
      %p167 = pneg %p166
    $region22: #{tpu_custom_call.1} parent=5 // pred_check_branch
      %169 = sbr.rel (%p167) target = $region24
    $region23: #{tpu_custom_call.1} parent=5 // pred_region
      // Predicated region
      $region25: #{tpu_custom_call.1} parent=23 // pred_check
        %p170 = pneg %p50
      $region26: #{tpu_custom_call.1} parent=23 // pred_check_branch
        %172 = sbr.rel (%p170) target = $region28
      $region27: #{tpu_custom_call.1} parent=23 // pred_region
        %s173 = smul.u32 16, %s18
        %p174 = scmp.lt.s32.totalorder %s16, 1
        %s175 = scalar_select %p174, %s16, 1
        %p176 = scmp.lt.s32.totalorder %s173, 15
        %s177 = scalar_select %p176, %s173, 15
        %s178 = smul.addr %s175, 16
        %s179 = sadd.s32 %s177, %s178
        %s180 = smul.addr %s179, 4
        %s181 = scalar_lea.vmem %s0, %s180
        %s182 = smul.u32 16, %s18
      $region28: #{tpu_custom_call.1} parent=23 // pred_fallthru
        _
    $region24: #{tpu_custom_call.1} parent=5 // pred_fallthru
      _
    %p183 = scmp.le.s32.totalorder 1, %s9
    %p184 = scmp.lt.s32.totalorder %s9, 3
    %p185 = pnand %p183, %p184
    %p186 = pneg %p185
    // Predicated region
    $region29: #{tpu_custom_call.1} parent=5 // pred_check
      _
    $region30: #{tpu_custom_call.1} parent=5 // pred_check_branch
      %188 = sbr.rel (%p185) target = $region32
    $region31: #{tpu_custom_call.1} parent=5 // pred_region
      %s189 = ssub.s32 %s9, 1
      %s190 = smul.u32 16, %s21
      %p191 = scmp.lt.s32.totalorder %s19, 1
      %s192 = scalar_select %p191, %s19, 1
      %p193 = scmp.lt.s32.totalorder %s190, 15
      %s194 = scalar_select %p193, %s190, 15
      %s195 = smul.addr %s192, 16
      %s196 = sadd.s32 %s194, %s195
      %s197 = smul.addr %s196, 4
      %s198 = scalar_lea.vmem %s0, %s197
      %p199 = pneg %p56
      %p200 = pneg %p53
      %p201 = scmp.lt.s32.totalorder %s20, 0
      %s202 = scalar_select %p201, %s20, 0
      %s203 = smul.addr %s202, 4
      %s204 = scalar_lea.vmem %s1, %s203
      %p205 = pneg %p82
      %p206 = pneg %p79
      %p207 = scmp.lt.s32.totalorder %s20, 0
      %s208 = scalar_select %p207, %s20, 0
      %s209 = scalar_lea.vmem %s2, %s208
      %p210 = pneg %p108
      %p211 = pneg %p105
      %p212 = pneg %p138
      %p213 = pneg %p135
      %s214 = smul.u32 16, %s21
      %p215 = scmp.lt.s32.totalorder %s19, 1
      %s216 = scalar_select %p215, %s19, 1
      %p217 = scmp.lt.s32.totalorder %s214, 15
      %s218 = scalar_select %p217, %s214, 15
      %p219 = scmp.lt.s32.totalorder %s20, 0
      %s220 = scalar_select %p219, %s20, 0
      %s221 = sadd.s32 %s220, %s218
      %s222 = smul.addr %s216, 16
      %s223 = sadd.s32 %s221, %s222
      %s224 = smul.addr %s223, 4
      %s225 = scalar_lea.vmem %s3, %s224
      %s226 = smul.u32 16, %s21
      %p227 = scmp.lt.s32.totalorder %s19, 1
      %s228 = scalar_select %p227, %s19, 1
      %p229 = scmp.lt.s32.totalorder %s226, 15
      %s230 = scalar_select %p229, %s226, 15
      %s231 = smul.addr %s228, 16
      %s232 = sadd.s32 %s230, %s231
      %s233 = smul.addr %s232, 4
      %s234 = scalar_lea.vmem %s0, %s233
      %s235 = smul.u32 16, %s21
      %p236 = scmp.lt.s32.totalorder %s20, 0
      %s237 = scalar_select %p236, %s20, 0
      %s238 = smul.addr %s237, 4
      %s239 = scalar_lea.vmem %s1, %s238
      %p240 = scmp.lt.s32.totalorder %s20, 0
      %s241 = scalar_select %p240, %s20, 0
      %s242 = scalar_lea.vmem %s2, %s241
      %s243 = smul.u32 16, %s21
      %p244 = scmp.lt.s32.totalorder %s19, 1
      %s245 = scalar_select %p244, %s19, 1
      %p246 = scmp.lt.s32.totalorder %s243, 15
      %s247 = scalar_select %p246, %s243, 15
      %p248 = scmp.lt.s32.totalorder %s20, 0
      %s249 = scalar_select %p248, %s20, 0
      %s250 = sadd.s32 %s249, %s247
      %s251 = smul.addr %s245, 16
      %s252 = sadd.s32 %s250, %s251
      %s253 = smul.addr %s252, 4
      %s254 = scalar_lea.vmem %s3, %s253
      %s255 = smul.u32 16, %s21
      %v257 = vld [vmem:[%s242] sm:$0x1]
      %v259 = vlaneseq
      %v260 = vshrl.u32 %v259, 7
      %v261 = vsub.s32 0, %v260
      %v262 = vrot.slane %v257, %v261
      %v264 = vld [vmem:[%s234] sm:$0xf]
      %v265 = vld [vmem:[%s234 + $0x4] sm:$0xf]
      %v266 = vld [vmem:[%s234 + $0x8] sm:$0xf]
      %v267 = vld [vmem:[%s234 + $0xc] sm:$0xf]
      %v268 = vld [vmem:[%s234 + $0x10] sm:$0xf]
      %v269 = vld [vmem:[%s234 + $0x14] sm:$0xf]
      %v270 = vld [vmem:[%s234 + $0x18] sm:$0xf]
      %v271 = vld [vmem:[%s234 + $0x1c] sm:$0xf]
      %v272 = vld [vmem:[%s234 + $0x20] sm:$0xf]
      %v273 = vld [vmem:[%s234 + $0x24] sm:$0xf]
      %v274 = vld [vmem:[%s234 + $0x28] sm:$0xf]
      %v275 = vld [vmem:[%s234 + $0x2c] sm:$0xf]
      %v276 = vld [vmem:[%s234 + $0x30] sm:$0xf]
      %v277 = vld [vmem:[%s234 + $0x34] sm:$0xf]
      %v278 = vld [vmem:[%s234 + $0x38] sm:$0xf]
      %v279 = vld [vmem:[%s234 + $0x3c] sm:$0xf]
      %v280 = vld [vmem:[%s239] sm:$0xf]
      %v281 = vld [vmem:[%s239 + $0x4] sm:$0xf]
      %v282 = vld [vmem:[%s239 + $0x8] sm:$0xf]
      %v283 = vld [vmem:[%s239 + $0xc] sm:$0x3]
      %v300 = vunpack.c.l.b16 %v264
      %v301 = vunpack.c.l.b16 %v265
      %v302 = vunpack.c.l.b16 %v266
      %v303 = vunpack.c.l.b16 %v267
      %v304 = vunpack.c.l.b16 %v268
      %v305 = vunpack.c.l.b16 %v269
      %v306 = vunpack.c.l.b16 %v270
      %v307 = vunpack.c.l.b16 %v271
      %v308 = vunpack.c.l.b16 %v272
      %v309 = vunpack.c.l.b16 %v273
      %v310 = vunpack.c.l.b16 %v274
      %v311 = vunpack.c.l.b16 %v275
      %v312 = vunpack.c.l.b16 %v276
      %v313 = vunpack.c.l.b16 %v277
      %v314 = vunpack.c.l.b16 %v278
      %v315 = vunpack.c.l.b16 %v279
      %v316 = vpack.c.b16 %v301, %v300
      %v317 = vpack.c.b16 %v303, %v302
      %v318 = vpack.c.b16 %v305, %v304
      %v319 = vpack.c.b16 %v307, %v306
      %v320 = vpack.c.b16 %v309, %v308
      %v321 = vpack.c.b16 %v311, %v310
      %v322 = vpack.c.b16 %v313, %v312
      %v323 = vpack.c.b16 %v315, %v314
      %v328 = vunpack.c.l.b16 %v280
      %v329 = vunpack.c.l.b16 %v281
      %v330 = vunpack.c.l.b16 %v282
      %v331 = vunpack.c.l.b16 %v283
      %v332 = vpack.c.b16 %v329, %v328
      %v333 = vpack.c.b16 %v331, %v330
      %vm335 = vcmask 220160
      %v337 = vsel %vm335, %v316, 0
      %v340 = vsel %vm335, %v317, 0
      %v343 = vsel %vm335, %v318, 0
      %v346 = vsel %vm335, %v319, 0
      %v349 = vsel %vm335, %v320, 0
      %v352 = vsel %vm335, %v321, 0
      %v355 = vsel %vm335, %v322, 0
      %v358 = vsel %vm335, %v323, 0
      %vm360 = vcmask 1044480
      %vm361 = vcmask 1045504
      %v362 = vsel %vm360, 4294967295, 65535
      %v363 = vsel %vm361, %v362, 0
      %v365 = vand.u32 %v333, %v363
      %367 = vmatprep.subr.bf16.mxu0 0
      %368 = vmatpush1.bf16.msra.mxu0 0
      %369 = vmatprep.subr.bf16.mxu0 0
      %370 = vmatpush1.bf16.msra.mxu0 0
      %371 = vmatprep.subr.bf16.mxu0 0
      %372 = vmatpush1.bf16.msra.mxu0 0
      %373 = vmatprep.subr.bf16.mxu0 0
      %374 = vmatpush1.bf16.msra.mxu0 0
      %375 = vmatprep.subr.bf16.mxu0 0
      %376 = vmatpush1.bf16.msra.mxu0 0
      %377 = vmatprep.subr.bf16.mxu0 0
      %378 = vmatpush1.bf16.msra.mxu0 0
      %379 = vmatprep.subr.bf16.mxu0 0
      %380 = vmatpush1.bf16.msra.mxu0 %v365
      %381 = vmatprep.subr.bf16.mxu0 0
      %382 = vmatpush1.bf16.msra.mxu0 %v332
      %383 = vmatprep.subr.bf16.mxu0 0
      %384 = vmatpush2.bf16.msra.mxu0 0
      %385 = vmatprep.subr.bf16.mxu0 0
      %386 = vmatpush2.bf16.msra.mxu0 0
      %387 = vmatprep.subr.bf16.mxu0 0
      %388 = vmatpush2.bf16.msra.mxu0 0
      %389 = vmatprep.subr.bf16.mxu0 0
      %390 = vmatpush2.bf16.msra.mxu0 0
      %391 = vmatprep.subr.bf16.mxu0 0
      %392 = vmatpush2.bf16.msra.mxu0 0
      %393 = vmatprep.subr.bf16.mxu0 0
      %394 = vmatpush2.bf16.msra.mxu0 0
      %395 = vmatprep.subr.bf16.mxu0 0
      %396 = vmatpush2.bf16.msra.mxu0 0
      %397 = vmatprep.subr.bf16.mxu0 0
      %398 = vmatpush2.bf16.msra.mxu0 0
      %399 = vmatprep.mubr.bf16.mxu0 0
      %400 = vmatmul.mubr.bf16.gmra.mxu0 %v337
      %v401 = vpop.f32.mrf.mxu0
      %v402 = vadd.f32 0.0, %v401
      %v403 = vpop.f32.mrf.mxu0
      %v404 = vpop.f32.mrf.mxu0
      %v405 = vadd.f32 0.0, %v404
      %v406 = vpop.f32.mrf.mxu0
      %407 = vmatprep.mubr.bf16.mxu0 0
      %408 = vmatmul.mubr.bf16.gmra.mxu0 %v340
      %v409 = vpop.f32.mrf.mxu0
      %v410 = vadd.f32 0.0, %v409
      %v411 = vpop.f32.mrf.mxu0
      %v412 = vpop.f32.mrf.mxu0
      %v413 = vadd.f32 0.0, %v412
      %v414 = vpop.f32.mrf.mxu0
      %415 = vmatprep.mubr.bf16.mxu0 0
      %416 = vmatmul.mubr.bf16.gmra.mxu0 %v343
      %v417 = vpop.f32.mrf.mxu0
      %v418 = vadd.f32 0.0, %v417
      %v419 = vpop.f32.mrf.mxu0
      %v420 = vpop.f32.mrf.mxu0
      %v421 = vadd.f32 0.0, %v420
      %v422 = vpop.f32.mrf.mxu0
      %423 = vmatprep.mubr.bf16.mxu0 0
      %424 = vmatmul.mubr.bf16.gmra.mxu0 %v346
      %v425 = vpop.f32.mrf.mxu0
      %v426 = vadd.f32 0.0, %v425
      %v427 = vpop.f32.mrf.mxu0
      %v428 = vpop.f32.mrf.mxu0
      %v429 = vadd.f32 0.0, %v428
      %v430 = vpop.f32.mrf.mxu0
      %431 = vmatprep.mubr.bf16.mxu0 0
      %432 = vmatmul.mubr.bf16.gmra.mxu0 %v349
      %v433 = vpop.f32.mrf.mxu0
      %v434 = vadd.f32 0.0, %v433
      %v435 = vpop.f32.mrf.mxu0
      %v436 = vpop.f32.mrf.mxu0
      %v437 = vadd.f32 0.0, %v436
      %v438 = vpop.f32.mrf.mxu0
      %439 = vmatprep.mubr.bf16.mxu0 0
      %440 = vmatmul.mubr.bf16.gmra.mxu0 %v352
      %v441 = vpop.f32.mrf.mxu0
      %v442 = vadd.f32 0.0, %v441
      %v443 = vpop.f32.mrf.mxu0
      %v444 = vpop.f32.mrf.mxu0
      %v445 = vadd.f32 0.0, %v444
      %v446 = vpop.f32.mrf.mxu0
      %447 = vmatprep.mubr.bf16.mxu0 0
      %448 = vmatmul.mubr.bf16.gmra.mxu0 %v355
      %v449 = vpop.f32.mrf.mxu0
      %v450 = vadd.f32 0.0, %v449
      %v451 = vpop.f32.mrf.mxu0
      %v452 = vpop.f32.mrf.mxu0
      %v453 = vadd.f32 0.0, %v452
      %v454 = vpop.f32.mrf.mxu0
      %455 = vmatprep.mubr.bf16.mxu0 0
      %456 = vmatmul.mubr.bf16.gmra.mxu0 %v358
      %v457 = vpop.f32.mrf.mxu0
      %v458 = vadd.f32 0.0, %v457
      %v459 = vpop.f32.mrf.mxu0
      %v460 = vpop.f32.mrf.mxu0
      %v461 = vadd.f32 0.0, %v460
      %v462 = vpop.f32.mrf.mxu0
      %463 = vdwg.mxu0
      %v464 = vadd.f32 %v262, %v402
      %v465 = vadd.f32 %v262, %v405
      %v466 = vadd.f32 %v262, %v410
      %v467 = vadd.f32 %v262, %v413
      %v468 = vadd.f32 %v262, %v418
      %v469 = vadd.f32 %v262, %v421
      %v470 = vadd.f32 %v262, %v426
      %v471 = vadd.f32 %v262, %v429
      %v472 = vadd.f32 %v262, %v434
      %v473 = vadd.f32 %v262, %v437
      %v474 = vadd.f32 %v262, %v442
      %v475 = vadd.f32 %v262, %v445
      %v476 = vadd.f32 %v262, %v450
      %v477 = vadd.f32 %v262, %v453
      %v478 = vadd.f32 %v262, %v458
      %v479 = vadd.f32 %v262, %v461
      %v480 = vmax.f32 %v464, 0.0
      %v481 = vmax.f32 %v465, 0.0
      %v482 = vmax.f32 %v466, 0.0
      %v483 = vmax.f32 %v467, 0.0
      %v484 = vmax.f32 %v468, 0.0
      %v485 = vmax.f32 %v469, 0.0
      %v486 = vmax.f32 %v470, 0.0
      %v487 = vmax.f32 %v471, 0.0
      %v488 = vmax.f32 %v472, 0.0
      %v489 = vmax.f32 %v473, 0.0
      %v490 = vmax.f32 %v474, 0.0
      %v491 = vmax.f32 %v475, 0.0
      %v492 = vmax.f32 %v476, 0.0
      %v493 = vmax.f32 %v477, 0.0
      %v494 = vmax.f32 %v478, 0.0
      %v495 = vmax.f32 %v479, 0.0
      %v496 = vpack.c.bf16 %v481, %v480
      %v497 = vpack.c.bf16 %v483, %v482
      %v498 = vpack.c.bf16 %v485, %v484
      %v499 = vpack.c.bf16 %v487, %v486
      %v500 = vpack.c.bf16 %v489, %v488
      %v501 = vpack.c.bf16 %v491, %v490
      %v502 = vpack.c.bf16 %v493, %v492
      %v503 = vpack.c.bf16 %v495, %v494
      %v512 = vunpack.c.l.b16 %v496
      %v513 = vunpack.c.h.b16 %v496
      %v514 = vunpack.c.l.b16 %v497
      %v515 = vunpack.c.h.b16 %v497
      %v516 = vunpack.c.l.b16 %v498
      %v517 = vunpack.c.h.b16 %v498
      %v518 = vunpack.c.l.b16 %v499
      %v519 = vunpack.c.h.b16 %v499
      %v520 = vunpack.c.l.b16 %v500
      %v521 = vunpack.c.h.b16 %v500
      %v522 = vunpack.c.l.b16 %v501
      %v523 = vunpack.c.h.b16 %v501
      %v524 = vunpack.c.l.b16 %v502
      %v525 = vunpack.c.h.b16 %v502
      %v526 = vunpack.c.l.b16 %v503
      %v527 = vunpack.c.h.b16 %v503
      %v528 = vpack.c.b16 %v512, %v512
      %v529 = vpack.c.b16 %v513, %v513
      %v530 = vpack.c.b16 %v514, %v514
      %v531 = vpack.c.b16 %v515, %v515
      %v532 = vpack.c.b16 %v516, %v516
      %v533 = vpack.c.b16 %v517, %v517
      %v534 = vpack.c.b16 %v518, %v518
      %v535 = vpack.c.b16 %v519, %v519
      %v536 = vpack.c.b16 %v520, %v520
      %v537 = vpack.c.b16 %v521, %v521
      %v538 = vpack.c.b16 %v522, %v522
      %v539 = vpack.c.b16 %v523, %v523
      %v540 = vpack.c.b16 %v524, %v524
      %v541 = vpack.c.b16 %v525, %v525
      %v542 = vpack.c.b16 %v526, %v526
      %v543 = vpack.c.b16 %v527, %v527
      %vm560 = vcmask 519168
      %561 = vst.msk [vmem:[%s254] sm:$0xf] %vm560, %v528
      %562 = vst.msk [vmem:[%s254 + $0x4] sm:$0xf] %vm560, %v529
      %563 = vst.msk [vmem:[%s254 + $0x8] sm:$0xf] %vm560, %v530
      %564 = vst.msk [vmem:[%s254 + $0xc] sm:$0xf] %vm560, %v531
      %565 = vst.msk [vmem:[%s254 + $0x10] sm:$0xf] %vm560, %v532
      %566 = vst.msk [vmem:[%s254 + $0x14] sm:$0xf] %vm560, %v533
      %567 = vst.msk [vmem:[%s254 + $0x18] sm:$0xf] %vm560, %v534
      %568 = vst.msk [vmem:[%s254 + $0x1c] sm:$0xf] %vm560, %v535
      %569 = vst.msk [vmem:[%s254 + $0x20] sm:$0xf] %vm560, %v536
      %570 = vst.msk [vmem:[%s254 + $0x24] sm:$0xf] %vm560, %v537
      %571 = vst.msk [vmem:[%s254 + $0x28] sm:$0xf] %vm560, %v538
      %572 = vst.msk [vmem:[%s254 + $0x2c] sm:$0xf] %vm560, %v539
      %573 = vst.msk [vmem:[%s254 + $0x30] sm:$0xf] %vm560, %v540
      %574 = vst.msk [vmem:[%s254 + $0x34] sm:$0xf] %vm560, %v541
      %575 = vst.msk [vmem:[%s254 + $0x38] sm:$0xf] %vm560, %v542
      %576 = vst.msk [vmem:[%s254 + $0x3c] sm:$0xf] %vm560, %v543
      %s577 = smul.u32 16, %s21
      %p578 = scmp.lt.s32.totalorder %s19, 1
      %s579 = scalar_select %p578, %s19, 1
      %p580 = scmp.lt.s32.totalorder %s577, 15
      %s581 = scalar_select %p580, %s577, 15
      %p582 = scmp.lt.s32.totalorder %s20, 0
      %s583 = scalar_select %p582, %s20, 0
      %s584 = sadd.s32 %s583, %s581
      %s585 = smul.addr %s579, 16
      %s586 = sadd.s32 %s584, %s585
      %s587 = smul.addr %s586, 4
      %s588 = scalar_lea.vmem %s3, %s587
      // Predicated region
      $region33: #{tpu_custom_call.1} parent=31 // pred_check
        %p589 = pneg %p135
      $region34: #{tpu_custom_call.1} parent=31 // pred_check_branch
        %591 = sbr.rel (%p589) target = $region36
      $region35: #{tpu_custom_call.1} parent=31 // pred_region
        %s592 = smul.u32 16, %s21
      $region36: #{tpu_custom_call.1} parent=31 // pred_fallthru
        _
    $region32: #{tpu_custom_call.1} parent=5 // pred_fallthru
      _
    %p593 = scmp.le.s32.totalorder 2, %s9
    // Predicated region
    $region37: #{tpu_custom_call.1} parent=5 // pred_check
      %p594 = pneg %p593
    $region38: #{tpu_custom_call.1} parent=5 // pred_check_branch
      %596 = sbr.rel (%p594) target = $region40
    $region39: #{tpu_custom_call.1} parent=5 // pred_region
      %s597 = ssub.s32 %s9, 2
      // Predicated region
      $region41: #{tpu_custom_call.1} parent=39 // pred_check
        %p598 = pneg %p141
      $region42: #{tpu_custom_call.1} parent=39 // pred_check_branch
        %600 = sbr.rel (%p598) target = $region44
      $region43: #{tpu_custom_call.1} parent=39 // pred_region
        %s601 = smul.u32 16, %s24
        %p602 = scmp.lt.s32.totalorder %s22, 1
        %s603 = scalar_select %p602, %s22, 1
        %p604 = scmp.lt.s32.totalorder %s601, 15
        %s605 = scalar_select %p604, %s601, 15
        %p606 = scmp.lt.s32.totalorder %s23, 0
        %s607 = scalar_select %p606, %s23, 0
        %s608 = sadd.s32 %s607, %s605
        %s609 = smul.addr %s603, 16
        %s610 = sadd.s32 %s608, %s609
        %s611 = smul.addr %s610, 4
        %s612 = scalar_lea.vmem %s3, %s611
      $region44: #{tpu_custom_call.1} parent=39 // pred_fallthru
        _
    $region40: #{tpu_custom_call.1} parent=5 // pred_fallthru
      _
  $region6: #{tpu_custom_call.1} parent=0 // loop_footer
    %s13 = sadd.s32 1, %s9
  $region7: #{tpu_custom_call.1} parent=0 // loop_footer_branch
    %8 = sbr.rel target = $region3
  $region8: #{tpu_custom_call.1} parent=0 // loop_exit
    _

</llo_original>
